<compile_context>
chip_gen: v6e
topology: v6e:2x2x1
jax: 0.10.0
libtpu: 0.0.40
codegen_flags: <defaults>
</compile_context>

<pallas_src>
import math
from functools import partial
from typing import NamedTuple

import jax
import jax.numpy as jnp
from jax import lax
from jax.experimental import pallas as pl
from jax.experimental.pallas import tpu as pltpu

_TWO_PI = 2.0 * math.pi
_LANES = 128
_SUBLANES = 8


def _round_up(x, m):
    return ((x + m - 1) // m) * m


def _arc_sq_acc_kernel(p_ref, t_ref, acc_ref, *, block_rows, bpc, nblocks,
                       rows, mask_dup, mask_rows):
    """Accumulate per-lane sums of squared (unit-radius) arc lengths."""
    i = pl.program_id(1)                       # reduction axis (blocks per core)

    @pl.when(i == 0)
    def _init():
        acc_ref[...] = jnp.zeros_like(acc_ref)

    blk = pl.program_id(0) * bpc + i           # global block index

    def _accumulate():
        # Widen narrow dtypes in-register; HBM traffic stays in source dtype.
        p = p_ref[...].astype(jnp.float32)     # (block_rows, 128)
        t = t_ref[...].astype(jnp.float32)
        d = jnp.abs(p - t)
        d = jnp.minimum(d, _TWO_PI - d)        # periodic (wrap-around) angular diff
        d2 = d * d                             # radius applied once in the wrapper
        if mask_rows:
            # Last (partial) block: rows past the array end are undefined.
            row = blk * block_rows + lax.broadcasted_iota(
                jnp.int32, (block_rows, _LANES), 0)
            d2 = jnp.where(row < rows, d2, 0.0)
        # Fold the block's sublane-tiles into one vreg-shaped partial sum
        # (layout-preserving reshape + VPU adds; no XLU cross-lane reduce).
        acc_ref[...] += jnp.sum(d2.reshape(-1, _SUBLANES, _LANES), axis=0)

    if mask_dup:
        # Grid may over-cover the array when blocks don't split evenly across
        # the parallel cores; clamped duplicate blocks contribute nothing.
        pl.when(blk < nblocks)(_accumulate)
    else:
        _accumulate()


def spherical_axis_aligned_arc_loss(y_pred_vertices, y_true_vertices,
                                    radius=None, *, max_block_rows=1024,
                                    num_cores=2):
    """y_*_vertices: (..., 2) angles. Returns scalar loss (float32)."""
    r = 1.0 if radius is None else float(radius)

    # Keep the natural interleaved layout; flattening is a free reshape.
    p = jnp.reshape(y_pred_vertices, (-1,))
    t = jnp.reshape(y_true_vertices, (-1,))
    total = p.shape[0]
    assert total == t.shape[0] and total % 2 == 0 and total > 0
    n_vert = total // 2                        # elements per channel (theta/phi)

    # Pad flat length to a multiple of 8*128 so the (rows, 128) reshape is
    # free and every block is sublane-dense.  Copy happens only when needed;
    # padded zeros contribute arc length 0 (mean divides by true n_vert).
    padded = _round_up(total, _SUBLANES * _LANES)
    if padded != total:
        pad = padded - total
        p = jnp.pad(p, (0, pad))
        t = jnp.pad(t, (0, pad))
    rows = padded // _LANES                    # multiple of 8
    p2 = p.reshape(rows, _LANES)
    t2 = t.reshape(rows, _LANES)

    # Block sizing: sublane/lane-dense (block_rows, 128) tiles (~512 KiB per
    # input block by default), adapted down for small inputs.
    block_rows = min(max_block_rows,
                     _round_up(pl.cdiv(rows, num_cores), _SUBLANES))
    nblocks = pl.cdiv(rows, block_rows)
    num_cores_eff = max(1, min(num_cores, nblocks))
    bpc = pl.cdiv(nblocks, num_cores_eff)      # blocks per (parallel) core
    mask_dup = (num_cores_eff * bpc) > nblocks
    mask_rows = (rows % block_rows) != 0

    if mask_dup:
        in_idx = lambda c, i: (jnp.minimum(c * bpc + i, nblocks - 1), 0)
    else:
        in_idx = lambda c, i: (c * bpc + i, 0)

    itemsize = jnp.dtype(p2.dtype).itemsize
    cost = pl.CostEstimate(
        flops=6 * padded,
        transcendentals=0,
        bytes_accessed=2 * padded * itemsize
                       + num_cores_eff * _SUBLANES * _LANES * 4)

    acc = pl.pallas_call(
        partial(_arc_sq_acc_kernel, block_rows=block_rows, bpc=bpc,
                nblocks=nblocks, rows=rows,
                mask_dup=mask_dup, mask_rows=mask_rows),
        out_shape=jax.ShapeDtypeStruct((num_cores_eff, _SUBLANES, _LANES),
                                       jnp.float32),
        grid_spec=pltpu.PrefetchScalarGridSpec(
            num_scalar_prefetch=0,
            grid=(num_cores_eff, bpc),
            in_specs=[
                pl.BlockSpec((block_rows, _LANES), in_idx),
                pl.BlockSpec((block_rows, _LANES), in_idx),
            ],
            out_specs=pl.BlockSpec((None, _SUBLANES, _LANES),
                                   lambda c, i: (c, 0, 0)),
        ),
        compiler_params=pltpu.CompilerParams(
            dimension_semantics=("parallel", "arbitrary")),
        cost_estimate=cost,
    )(p2, t2)

    # Finalization (tiny, plain JAX on a (cores, 8, 128) array):
    # theta components live on even lanes, phi on odd lanes (flat index parity).
    lane_even = (jnp.arange(_LANES) % 2) == 0
    sum_even = jnp.sum(jnp.where(lane_even, acc, 0.0))   # sum(d_theta^2)
    sum_all = jnp.sum(acc)
    sum_odd = sum_all - sum_even                         # sum(d_phi^2)
    inv_n = 1.0 / float(n_vert)
    theta = r * jnp.sqrt(sum_even * inv_n)               # r * sqrt(mean(d^2))
    phi = r * jnp.sqrt(sum_odd * inv_n)
    return theta + phi


class Surface(NamedTuple):
    # stand-in for the surface object whose `.vertices` the torch module reads
    vertices: jnp.ndarray


class SphericalAxisAlignedArcLossTensor:
    def __init__(self, radius=None):
        self.radius = radius

    def __call__(self, y_pred, y_true):
        return spherical_axis_aligned_arc_loss(y_pred, y_true, self.radius)


class SphericalAxisAlignedArcLoss:
    def __init__(self, radius=None):
        self._tensor_loss = SphericalAxisAlignedArcLossTensor(radius)

    def __call__(self, y_pred, y_true):
        return self._tensor_loss(y_pred.vertices, y_true.vertices)


def _reference_loss(pred_v, true_v, radius=None):
    # TODO(synk): sphere_utils.compute_axis_aligned_arc_length source not
    # available; periodic angular-difference arc length assumed (matches kernel).
    r = 1.0 if radius is None else float(radius)

    def arc(a, b):
        d = jnp.abs(a - b)
        d = jnp.minimum(d, 2.0 * jnp.pi - d)
        return d * r

    theta = jnp.sqrt(jnp.mean(arc(pred_v[..., 0], true_v[..., 0]) ** 2))
    phi = jnp.sqrt(jnp.mean(arc(pred_v[..., 1], true_v[..., 1]) ** 2))
    return theta + phi


if __name__ == "__main__":
    key = jax.random.PRNGKey(0)
    k1, k2 = jax.random.split(key)

    # Small shapes consistent with the module: batch=2, 512 vertices, 2 coords.
    B, V = 2, 512
    y_pred_v = jax.random.uniform(k1, (B, V, 2), jnp.float32,
                                  minval=0.0, maxval=2.0 * jnp.pi)
    y_true_v = jax.random.uniform(k2, (B, V, 2), jnp.float32,
                                  minval=0.0, maxval=2.0 * jnp.pi)

    loss_mod = SphericalAxisAlignedArcLoss(radius=100.0)
    out = loss_mod(Surface(y_pred_v), Surface(y_true_v))
    out = jax.block_until_ready(out)

    ref = _reference_loss(y_pred_v, y_true_v, radius=100.0)
    assert jnp.isfinite(out), "non-finite loss"
    assert jnp.allclose(out, ref, rtol=1e-5, atol=1e-5), (out, ref)

    # Also exercise a ragged vertex count (padded / masked paths).
    Vr = 300
    yp = jax.random.uniform(k1, (1, Vr, 2), jnp.float32, 0.0, 2.0 * jnp.pi)
    yt = jax.random.uniform(k2, (1, Vr, 2), jnp.float32, 0.0, 2.0 * jnp.pi)
    out2 = jax.block_until_ready(spherical_axis_aligned_arc_loss(yp, yt, 1.0))
    ref2 = _reference_loss(yp, yt, 1.0)
    assert jnp.allclose(out2, ref2, rtol=1e-5, atol=1e-5), (out2, ref2)

    print("KERNEL_OK")
</pallas_src>

<mosaic_0001>
module attributes {stable_mosaic.version = 11 : i64} {
  func.func @_arc_sq_acc_kernel(%arg0: i32, %arg1: i32, %arg2: memref<8x128xf32, #tpu.memory_space<vmem>>, %arg3: memref<8x128xf32, #tpu.memory_space<vmem>>, %arg4: memref<1x8x128xf32, #tpu.memory_space<vmem>>) attributes {dimension_semantics = [#tpu.dimension_semantics<parallel>, #tpu.dimension_semantics<arbitrary>], iteration_bounds = array<i64: 2, 1>, scalar_prefetch = 0 : i64, scratch_operands = 0 : i64, tpu.core_type = #tpu.core_type<tc>, window_params = [{transform_indices = @transform_0, window_bounds = array<i64: 8, 128>}, {transform_indices = @transform_1, window_bounds = array<i64: 8, 128>}, {transform_indices = @transform_2, window_bounds = array<i64: 1, 8, 128>}]} {
    %c0_i32 = arith.constant 0 : i32
    %0 = arith.cmpi eq, %arg1, %c0_i32 : i32
    %1 = arith.extui %0 : i1 to i32
    %c0_i32_0 = arith.constant 0 : i32
    %2 = arith.cmpi ne, %1, %c0_i32_0 : i32
    scf.if %2 {
      %cst_11 = arith.constant 0.000000e+00 : f32
      %19 = vector.broadcast %cst_11 : f32 to vector<8x128xf32>
      %c0_12 = arith.constant 0 : index
      %c0_13 = arith.constant 0 : index
      %c0_14 = arith.constant 0 : index
      %20 = vector.load %arg4[%c0_12, %c0_13, %c0_14] : memref<1x8x128xf32, #tpu.memory_space<vmem>>, vector<1x8x128xf32>
      %21 = vector.shape_cast %20 : vector<1x8x128xf32> to vector<8x128xf32>
      %22 = vector.shape_cast %19 : vector<8x128xf32> to vector<1x8x128xf32>
      tpu.vector_store %arg4[%c0_12, %c0_13, %c0_14], %22 {strides = array<i32>} : memref<1x8x128xf32, #tpu.memory_space<vmem>>, vector<1x8x128xf32>,
    } else {
    }
    %c0 = arith.constant 0 : index
    %c0_1 = arith.constant 0 : index
    %3 = vector.load %arg2[%c0, %c0_1] : memref<8x128xf32, #tpu.memory_space<vmem>>, vector<8x128xf32>
    %c0_2 = arith.constant 0 : index
    %c0_3 = arith.constant 0 : index
    %4 = vector.load %arg3[%c0_2, %c0_3] : memref<8x128xf32, #tpu.memory_space<vmem>>, vector<8x128xf32>
    %5 = arith.subf %3, %4 : vector<8x128xf32>
    %6 = math.absf %5 : vector<8x128xf32>
    %cst = arith.constant 6.28318548 : f32
    %7 = vector.broadcast %cst : f32 to vector<8x128xf32>
    %8 = arith.subf %7, %6 : vector<8x128xf32>
    %9 = arith.minimumf %6, %8 : vector<8x128xf32>
    %10 = arith.mulf %9, %9 : vector<8x128xf32>
    %c0_4 = arith.constant 0 : index
    %c0_5 = arith.constant 0 : index
    %c0_6 = arith.constant 0 : index
    %11 = vector.load %arg4[%c0_4, %c0_5, %c0_6] : memref<1x8x128xf32, #tpu.memory_space<vmem>>, vector<1x8x128xf32>
    %12 = vector.shape_cast %11 : vector<1x8x128xf32> to vector<8x128xf32>
    %13 = vector.shape_cast %10 : vector<8x128xf32> to vector<1x8x128xf32>
    %cst_7 = arith.constant dense<0.000000e+00> : vector<8x128xf32>
    %14 = vector.multi_reduction <add>, %13, %cst_7 [0] : vector<1x8x128xf32> to vector<8x128xf32>
    %15 = arith.addf %12, %14 : vector<8x128xf32>
    %c0_8 = arith.constant 0 : index
    %c0_9 = arith.constant 0 : index
    %c0_10 = arith.constant 0 : index
    %16 = vector.load %arg4[%c0_8, %c0_9, %c0_10] : memref<1x8x128xf32, #tpu.memory_space<vmem>>, vector<1x8x128xf32>
    %17 = vector.shape_cast %16 : vector<1x8x128xf32> to vector<8x128xf32>
    %18 = vector.shape_cast %15 : vector<8x128xf32> to vector<1x8x128xf32>
    tpu.vector_store %arg4[%c0_8, %c0_9, %c0_10], %18 {strides = array<i32>} : memref<1x8x128xf32, #tpu.memory_space<vmem>>, vector<1x8x128xf32>,
    return
  }
  func.func @transform_0(%arg0: i32, %arg1: i32) -> (i32, i32) {
    %c1_i32 = arith.constant 1 : i32
    %0 = arith.muli %arg0, %c1_i32 : i32
    %1 = arith.addi %0, %arg1 : i32
    %c0_i32 = arith.constant 0 : i32
    %c0_i32_0 = arith.constant 0 : i32
    return %1, %c0_i32 : i32, i32
  }
  func.func @transform_1(%arg0: i32, %arg1: i32) -> (i32, i32) {
    %c1_i32 = arith.constant 1 : i32
    %0 = arith.muli %arg0, %c1_i32 : i32
    %1 = arith.addi %0, %arg1 : i32
    %c0_i32 = arith.constant 0 : i32
    %c0_i32_0 = arith.constant 0 : i32
    return %1, %c0_i32 : i32, i32
  }
  func.func @transform_2(%arg0: i32, %arg1: i32) -> (i32, i32, i32) {
    %c0_i32 = arith.constant 0 : i32
    %c0_i32_0 = arith.constant 0 : i32
    %c0_i32_1 = arith.constant 0 : i32
    return %arg0, %c0_i32, %c0_i32_0 : i32, i32, i32
  }
}

</mosaic_0001>

<llo_original>
// kernel: tpu_custom_call.1
$region0: #{tpu_custom_call.1}
  #allocation0 [shape = 'u32[]', space=smem, size = 0x4, offset = 0x4, fixed_abs, tag = 'smem constant byte address 0x4 - core index']
  #allocation1 [shape = 'u32[144,128]{1,0:T(1,128)}', space=vmem, size = 0x12000, scoped, tag = 'internal scratch']
  %s0 = inlined_call_operand.hbm [shape: f32[16,128], index: 0, kind: input, shape index: {}]
  %s1 = inlined_call_operand.hbm [shape: f32[16,128], index: 1, kind: input, shape index: {}]
  %s2 = inlined_call_operand.hbm [shape: f32[2,8,128], index: 2, kind: output, shape index: {}]
  %s3 = sld [smem:[#allocation0]]
  $region53: #{tpu_custom_call.1} parent=0
    _
  %s5 = ssub.s32 1, %s3
  %s6 = scalar_select 0, %s5, %s3
  $region1: #{tpu_custom_call.1} parent=0
    #allocation2 [shape = 'u8[8192]{0}', space=vmem, size = 0x2000, scoped, tag = 'input window, operand 0']
    #allocation3 [shape = 's32[2]{0}', space=sflag, size = 0x8, scoped, tag = 'scoped memory for tpu_custom_call.1']
    #allocation4 [shape = 's32[2]{0}', space=sflag, size = 0x8, scoped, tag = 'scoped memory for tpu_custom_call.1']
    #allocation5 [shape = 'u8[8192]{0}', space=vmem, size = 0x2000, scoped, tag = 'input window, operand 1']
    #allocation6 [shape = 's32[2]{0}', space=sflag, size = 0x8, scoped, tag = 'scoped memory for tpu_custom_call.1']
    #allocation7 [shape = 'u8[8192]{0}', space=vmem, size = 0x2000, scoped, tag = 'output window, operand 0']
    %7 = vsyncpa [#allocation3], 0
    %s8 = scalar_lea.sflag [#allocation3], 1
    %9 = vsyncpa %s8, 0
    %10 = vsyncpa [#allocation6], 0
    %s11 = scalar_lea.sflag [#allocation6], 1
    %12 = vsyncpa %s11, 0
    %13 = vsyncpa [#allocation4], 0
    %s14 = scalar_lea.sflag [#allocation4], 1
    %15 = vsyncpa %s14, 0
    loop: start=0, step=1, limit=4
    $region2: #{tpu_custom_call.1} parent=1 // loop_pre_header
      _
    $region3: #{tpu_custom_call.1} parent=1 // loop_header
      %s17 = sphi 0, %s21
      %p18 = scmp.ge.s32.totalorder %s17, 4
      %s24 = sphi 0, %s36
      %s25 = sphi 0, %s32
      %s26 = sphi 0, %s24
      %s27 = sphi 0, %s25
      %s28 = sphi 0, %s26
      %s29 = sphi 0, %s27
      %s41 = sphi 0, %s43
      %s44 = sphi 0, %s41
      %s45 = sphi 0, %s44
      %s61 = sphi 0, %s45
      %s69 = sphi 0, %s71
      %s72 = sphi 0, %s69
      %s73 = sphi 0, %s72
      %s89 = sphi 0, %s73
      %s95 = sphi 0, %s97
      %s98 = sphi 0, %s95
      %s99 = sphi 0, %s98
      %s115 = sphi 0, %s99
    $region4: #{tpu_custom_call.1} parent=1 // loop_header_branch
      %20 = sbr.rel (%p18) target = $region8
    $region5: #{tpu_custom_call.1} parent=1 // loop_body
      %s22 = ssub.s32 %s17, 1
      %s23 = ssub.s32 %s17, 2
      %s30 = sadd.s32 1, %s25
      %p31 = scmp.ge.s32.totalorder %s30, 1
      %s32 = scalar_select %p31, 0, %s30
      %s33 = sadd.s32 1, %s24
      %s34 = scalar_select %p31, %s33, %s24
      %p35 = scmp.ge.s32.totalorder %s34, 2
      %s36 = scalar_select %p35, 0, %s34
      %s37 = sadd.s32 %s24, %s25
      %s38 = sadd.s32 %s36, %s32
      %s39 = ssub.s32 %s37, %s38
      %p40 = scmp.eq.s32.totalorder %s39, 0
      %s42 = sadd.s32 %s41, 1
      %s43 = scalar_select %p40, %s41, %s42
      %p46 = pneg %p40
      %p47 = scmp.eq.s32.totalorder %s17, 1
      %p48 = por %p46, %p47
      %p49 = scmp.ne.s32.totalorder %s41, %s44
      %p50 = scmp.eq.s32.totalorder %s17, 0
      %p51 = por %p49, %p50
      %p52 = scmp.ne.s32.totalorder %s41, %s44
      %p53 = scmp.eq.s32.totalorder %s22, 1
      %p54 = por %p52, %p53
      %p55 = scmp.ne.s32.totalorder %s44, %s45
      %p56 = scmp.eq.s32.totalorder %s22, 0
      %p57 = por %p55, %p56
      %p58 = scmp.ne.s32.totalorder %s44, %s45
      %p59 = scmp.eq.s32.totalorder %s23, 1
      %p60 = por %p58, %p59
      %p62 = scmp.ne.s32.totalorder %s45, %s61
      %p63 = scmp.eq.s32.totalorder %s23, 0
      %p64 = por %p62, %p63
      %s65 = sadd.s32 %s24, %s25
      %s66 = sadd.s32 %s36, %s32
      %s67 = ssub.s32 %s65, %s66
      %p68 = scmp.eq.s32.totalorder %s67, 0
      %s70 = sadd.s32 %s69, 1
      %s71 = scalar_select %p68, %s69, %s70
      %p74 = pneg %p68
      %p75 = scmp.eq.s32.totalorder %s17, 1
      %p76 = por %p74, %p75
      %p77 = scmp.ne.s32.totalorder %s69, %s72
      %p78 = scmp.eq.s32.totalorder %s17, 0
      %p79 = por %p77, %p78
      %p80 = scmp.ne.s32.totalorder %s69, %s72
      %p81 = scmp.eq.s32.totalorder %s22, 1
      %p82 = por %p80, %p81
      %p83 = scmp.ne.s32.totalorder %s72, %s73
      %p84 = scmp.eq.s32.totalorder %s22, 0
      %p85 = por %p83, %p84
      %p86 = scmp.ne.s32.totalorder %s72, %s73
      %p87 = scmp.eq.s32.totalorder %s23, 1
      %p88 = por %p86, %p87
      %p90 = scmp.ne.s32.totalorder %s73, %s89
      %p91 = scmp.eq.s32.totalorder %s23, 0
      %p92 = por %p90, %p91
      %s93 = ssub.s32 %s24, %s36
      %p94 = scmp.eq.s32.totalorder %s93, 0
      %s96 = sadd.s32 %s95, 1
      %s97 = scalar_select %p94, %s95, %s96
      %p100 = pneg %p94
      %p101 = scmp.eq.s32.totalorder %s17, 1
      %p102 = por %p100, %p101
      %p103 = scmp.ne.s32.totalorder %s95, %s98
      %p104 = scmp.eq.s32.totalorder %s17, 0
      %p105 = por %p103, %p104
      %p106 = scmp.ne.s32.totalorder %s95, %s98
      %p107 = scmp.eq.s32.totalorder %s22, 1
      %p108 = por %p106, %p107
      %p109 = scmp.ne.s32.totalorder %s98, %s99
      %p110 = scmp.eq.s32.totalorder %s22, 0
      %p111 = por %p109, %p110
      %p112 = scmp.ne.s32.totalorder %s98, %s99
      %p113 = scmp.eq.s32.totalorder %s23, 1
      %p114 = por %p112, %p113
      %p116 = scmp.ne.s32.totalorder %s99, %s115
      %p117 = scmp.eq.s32.totalorder %s23, 0
      %p118 = por %p116, %p117
      %p119 = scmp.le.s32.totalorder 1, %s17
      %p120 = scmp.lt.s32.totalorder %s17, 3
      %p121 = pnand %p119, %p120
      %p122 = pneg %p121
      // Predicated region
      $region9: #{tpu_custom_call.1} parent=5 // pred_check
        _
      $region10: #{tpu_custom_call.1} parent=5 // pred_check_branch
        %124 = sbr.rel (%p121) target = $region12
      $region11: #{tpu_custom_call.1} parent=5 // pred_region
        %s125 = ssub.s32 %s17, 1
      $region12: #{tpu_custom_call.1} parent=5 // pred_fallthru
        _
      %p126 = scmp.lt.s32.totalorder %s17, 2
      // Predicated region
      $region13: #{tpu_custom_call.1} parent=5 // pred_check
        %p127 = pneg %p126
      $region14: #{tpu_custom_call.1} parent=5 // pred_check_branch
        %129 = sbr.rel (%p127) target = $region16
      $region15: #{tpu_custom_call.1} parent=5 // pred_region
        // Predicated region
        $region17: #{tpu_custom_call.1} parent=15 // pred_check
          %p130 = pneg %p51
        $region18: #{tpu_custom_call.1} parent=15 // pred_check_branch
          %132 = sbr.rel (%p130) target = $region20
        $region19: #{tpu_custom_call.1} parent=15 // pred_region
          %s133 = sand.u32 %s41, 1
          %s134 = scalar_lea.sflag [#allocation3], %s133
          %s135 = sand.u32 %s41, 1
          %s136 = smul.addr %s135, 8
          %s137 = scalar_lea.vmem [#allocation2], %s136
          %s138 = sadd.s32 %s24, %s25
          %s140 = ssub.s32 128, 128
          %141 = vsyncadd %s134, %s140
          %s142 = smul.addr %s138, 128
          %s143 = scalar_lea.hbm %s0, %s142
          %s145 = sshll.u32 %s137, 4
          %s146 = int_to_ptr.vmem [resolvable:$true] %s145
          %148 = dma.hbm_to_vmem [thread:$0]  %s143, 128, %s146, %s134
        $region20: #{tpu_custom_call.1} parent=15 // pred_fallthru
          _
        // Predicated region
        $region21: #{tpu_custom_call.1} parent=15 // pred_check
          %p149 = pneg %p79
        $region22: #{tpu_custom_call.1} parent=15 // pred_check_branch
          %151 = sbr.rel (%p149) target = $region24
        $region23: #{tpu_custom_call.1} parent=15 // pred_region
          %s152 = sand.u32 %s69, 1
          %s153 = scalar_lea.sflag [#allocation6], %s152
          %s154 = sand.u32 %s69, 1
          %s155 = smul.addr %s154, 8
          %s156 = scalar_lea.vmem [#allocation5], %s155
          %s157 = sadd.s32 %s24, %s25
          %s159 = ssub.s32 128, 128
          %160 = vsyncadd %s153, %s159
          %s161 = smul.addr %s157, 128
          %s162 = scalar_lea.hbm %s1, %s161
          %s164 = sshll.u32 %s156, 4
          %s165 = int_to_ptr.vmem [resolvable:$true] %s164
          %167 = dma.hbm_to_vmem [thread:$0]  %s162, 128, %s165, %s153
        $region24: #{tpu_custom_call.1} parent=15 // pred_fallthru
          _
      $region16: #{tpu_custom_call.1} parent=5 // pred_fallthru
        _
      %p168 = scmp.le.s32.totalorder 1, %s17
      %p169 = scmp.lt.s32.totalorder %s17, 3
      %p170 = pnand %p168, %p169
      %p171 = pneg %p170
      // Predicated region
      $region25: #{tpu_custom_call.1} parent=5 // pred_check
        _
      $region26: #{tpu_custom_call.1} parent=5 // pred_check_branch
        %173 = sbr.rel (%p170) target = $region28
      $region27: #{tpu_custom_call.1} parent=5 // pred_region
        %s174 = ssub.s32 %s17, 1
        %s175 = sand.u32 %s44, 1
        %s176 = scalar_lea.sflag [#allocation3], %s175
        %s177 = sand.u32 %s44, 1
        %s178 = smul.addr %s177, 8
        %s179 = scalar_lea.vmem [#allocation2], %s178
        // Predicated region
        $region29: #{tpu_custom_call.1} parent=27 // pred_check
          %p180 = pneg %p57
        $region30: #{tpu_custom_call.1} parent=27 // pred_check_branch
          %182 = sbr.rel (%p180) target = $region32
        $region31: #{tpu_custom_call.1} parent=27 // pred_region
          %183 = dma.done %s176, 128
        $region32: #{tpu_custom_call.1} parent=27 // pred_fallthru
          _
        %s184 = sand.u32 %s72, 1
        %s185 = scalar_lea.sflag [#allocation6], %s184
        %s186 = sand.u32 %s72, 1
        %s187 = smul.addr %s186, 8
        %s188 = scalar_lea.vmem [#allocation5], %s187
        // Predicated region
        $region33: #{tpu_custom_call.1} parent=27 // pred_check
          %p189 = pneg %p85
        $region34: #{tpu_custom_call.1} parent=27 // pred_check_branch
          %191 = sbr.rel (%p189) target = $region36
        $region35: #{tpu_custom_call.1} parent=27 // pred_region
          %192 = dma.done %s185, 128
        $region36: #{tpu_custom_call.1} parent=27 // pred_fallthru
          _
        %s193 = sand.u32 %s44, 1
        %s194 = scalar_lea.sflag [#allocation3], %s193
        %s195 = sand.u32 %s44, 1
        %s196 = smul.addr %s195, 8
        %s197 = scalar_lea.vmem [#allocation2], %s196
        %p198 = pneg %p57
        %p199 = pneg %p54
        %s200 = sand.u32 %s72, 1
        %s201 = scalar_lea.sflag [#allocation6], %s200
        %s202 = sand.u32 %s72, 1
        %s203 = smul.addr %s202, 8
        %s204 = scalar_lea.vmem [#allocation5], %s203
        %p205 = pneg %p85
        %p206 = pneg %p82
        %p207 = pneg %p111
        %p208 = pneg %p108
        %s209 = sand.u32 %s98, 1
        %s210 = scalar_lea.sflag [#allocation4], %s209
        %s211 = sand.u32 %s98, 1
        %s212 = smul.addr %s211, 8
        %s213 = scalar_lea.vmem [#allocation7], %s212
        %s214 = sadd.s32 %s26, %s27
        %s215 = sadd.s32 %s26, %s27
        %p216 = scmp.eq.s32.totalorder %s27, 0
        // Predicated region
        $region37: #{tpu_custom_call.1} parent=27 // pred_check
          %p217 = pneg %p216
        $region38: #{tpu_custom_call.1} parent=27 // pred_check_branch
          %219 = sbr.rel (%p217) target = $region40
        $region39: #{tpu_custom_call.1} parent=27 // pred_region
          %220 = vst [vmem:[%s213] sm:$0xff] 0.0
        $region40: #{tpu_custom_call.1} parent=27 // pred_fallthru
          _
        %v221 = vld [vmem:[%s179] sm:$0xff]
        %v222 = vld [vmem:[%s188] sm:$0xff]
        %v223 = vsub.f32 %v221, %v222
        %v224 = vand.u32 2147483647, %v223
        %v225 = vsub.f32 6.2831855, %v224
        %v226 = vmin.f32 %v224, %v225
        %v227 = vmul.f32 %v226, %v226
        %v228 = vld [vmem:[%s213] sm:$0xff]
        %v229 = vadd.f32 %v227, 0.0
        %v230 = vadd.f32 %v228, %v229
        %231 = vst [vmem:[%s213] sm:$0xff] %v230
        %s232 = sand.u32 %s98, 1
        %s233 = scalar_lea.sflag [#allocation4], %s232
        %s234 = sand.u32 %s98, 1
        %s235 = smul.addr %s234, 8
        %s236 = scalar_lea.vmem [#allocation7], %s235
        // Predicated region
        $region41: #{tpu_custom_call.1} parent=27 // pred_check
          %p237 = pneg %p108
        $region42: #{tpu_custom_call.1} parent=27 // pred_check_branch
          %239 = sbr.rel (%p237) target = $region44
        $region43: #{tpu_custom_call.1} parent=27 // pred_region
          %s241 = ssub.s32 128, 128
          %242 = vsyncadd %s233, %s241
          %s243 = smul.addr %s26, 128
          %s244 = scalar_lea.hbm %s2, %s243
          %s246 = sshll.u32 %s236, 4
          %s247 = int_to_ptr.vmem [resolvable:$true] %s246
          %249 = dma.vmem_to_hbm [thread:$0]  %s247, 128, %s244, %s233
        $region44: #{tpu_custom_call.1} parent=27 // pred_fallthru
          _
      $region28: #{tpu_custom_call.1} parent=5 // pred_fallthru
        _
      %p250 = scmp.le.s32.totalorder 2, %s17
      // Predicated region
      $region45: #{tpu_custom_call.1} parent=5 // pred_check
        %p251 = pneg %p250
      $region46: #{tpu_custom_call.1} parent=5 // pred_check_branch
        %253 = sbr.rel (%p251) target = $region48
      $region47: #{tpu_custom_call.1} parent=5 // pred_region
        %s254 = ssub.s32 %s17, 2
        // Predicated region
        $region49: #{tpu_custom_call.1} parent=47 // pred_check
          %p255 = pneg %p114
        $region50: #{tpu_custom_call.1} parent=47 // pred_check_branch
          %257 = sbr.rel (%p255) target = $region52
        $region51: #{tpu_custom_call.1} parent=47 // pred_region
          %s258 = sand.u32 %s99, 1
          %s259 = scalar_lea.sflag [#allocation4], %s258
          %s260 = sand.u32 %s99, 1
          %s261 = smul.addr %s260, 8
          %s262 = scalar_lea.vmem [#allocation7], %s261
          %263 = dma.done %s259, 128
        $region52: #{tpu_custom_call.1} parent=47 // pred_fallthru
          _
      $region48: #{tpu_custom_call.1} parent=5 // pred_fallthru
        _
    $region6: #{tpu_custom_call.1} parent=1 // loop_footer
      %s21 = sadd.s32 1, %s17
    $region7: #{tpu_custom_call.1} parent=1 // loop_footer_branch
      %16 = sbr.rel target = $region3
    $region8: #{tpu_custom_call.1} parent=1 // loop_exit
      _
    %264 = vsyncpa [#allocation3], 1
    %s265 = scalar_lea.sflag [#allocation3], 1
    %266 = vsyncpa %s265, 1
    %267 = vsyncpa [#allocation6], 1
    %s268 = scalar_lea.sflag [#allocation6], 1
    %269 = vsyncpa %s268, 1
    %270 = vsyncpa [#allocation4], 1
    %s271 = scalar_lea.sflag [#allocation4], 1
    %272 = vsyncpa %s271, 1

</llo_original>
